<compile_context>
chip_gen: v5e
topology: v5e:2x2
jax: 0.10.0
libtpu: 0.0.40
codegen_flags: <defaults>
</compile_context>

<pallas_src>
import functools
import math

import jax
import jax.numpy as jnp
from jax.experimental import pallas as pl
from jax.experimental.pallas import tpu as pltpu

_LANES = 128
_EPS = 1e-05


def _l2norm_kernel(x_ref, o_ref, acc_ref, *, feat_total, block_k):
    """Accumulate sum-of-squares over feature tiles; finalize on the last tile.

    x_ref  : (block_b, block_k) VMEM tile of the flattened input
    o_ref  : (block_b, 1)       output (resident across the reduction axis)
    acc_ref: (block_b, 1)       f32 partial-sum scratch
    """
    k = pl.program_id(1)
    nk = pl.num_programs(1)

    @pl.when(k == 0)
    def _init():
        acc_ref[...] = jnp.zeros_like(acc_ref)

    def _accumulate(masked):
        x = x_ref[...].astype(jnp.float32)
        if masked:
            bb, bk = x.shape
            # Valid columns remaining in this (last) feature tile.
            valid = feat_total - k * block_k
            col = jax.lax.broadcasted_iota(jnp.int32, (bb, bk), 1)
            x = jnp.where(col < valid, x, 0.0)
        # VPU folds across lane-tiles + one small XLU cross-lane reduce.
        acc_ref[...] += jnp.sum(x * x, axis=-1, keepdims=True)

    if feat_total % block_k == 0:
        # All feature tiles are full; no masking anywhere.
        _accumulate(masked=False)
    else:
        # Only the last feature tile pays for the mask.
        @pl.when(k < nk - 1)
        def _full():
            _accumulate(masked=False)

        @pl.when(k == nk - 1)
        def _tail():
            _accumulate(masked=True)

    @pl.when(k == nk - 1)
    def _finalize():
        ss = acc_ref[...]
        denom = float(feat_total)
        o_ref[...] = (jnp.sqrt(ss) / denom + _EPS).astype(o_ref.dtype)


def _round_up(n, m):
    return ((n + m - 1) // m) * m


def _default_tile_bytes():
    """Per-chip input-tile byte budget (double-buffered by BlockSpec)."""
    try:
        kind = jax.devices()[0].device_kind.lower()
    except Exception:
        return 4 << 20
    if "v7" in kind or "7x" in kind:
        return 6 << 20          # ~12 MiB double-buffered, inside 32 MiB scoped VMEM
    if "v6" in kind:
        return 4 << 20          # ~8 MiB double-buffered
    if "v5" in kind and ("lite" in kind or "v5e" in kind):
        return 2 << 20          # v5e: 16 MiB scoped-VMEM default
    return 4 << 20


def l2norm(x, *, block_b=None, block_k=None, tile_bytes=None):
    """Pallas implementation of L2Norm.forward. x: (B, ...) -> (B, 1)."""
    B = x.shape[0]
    F = math.prod(x.shape[1:]) if x.ndim > 1 else 1

    # Flatten exactly like torch.reshape(x.shape[0], -1); free (row-major bitcast).
    xf = x.reshape(B, F)
    dtype_bytes = jnp.dtype(xf.dtype).itemsize
    # Sublane packing per dtype: f32 -> 8, bf16 -> 16, int8/fp8 -> 32.
    packing = 8 * max(1, 4 // dtype_bytes)

    if tile_bytes is None:
        tile_bytes = _default_tile_bytes()

    # Batch tile: multiple of the sublane packing, capped at ceil(B/2) so the
    # parallel batch axis has >= 2 steps whenever possible (v7x megacore).
    if block_b is None:
        block_b = min(256, _round_up((B + 1) // 2, packing))
        block_b = max(block_b, packing)
    if block_b >= B:
        block_b = B                     # full-dim block (always a legal block shape)
    else:
        block_b = _round_up(block_b, packing)

    # Feature tile: multiple of 128 lanes, byte-budgeted per chip.
    if block_k is None:
        block_k = (tile_bytes // max(1, block_b * dtype_bytes)) // _LANES * _LANES
        block_k = max(_LANES, block_k)
    if block_k >= F:
        block_k = F                     # single full-width block (no tail mask needed)
    else:
        block_k = max(_LANES, (block_k // _LANES) * _LANES)

    n_b = pl.cdiv(B, block_b)
    n_k = pl.cdiv(F, block_k)

    kernel = functools.partial(_l2norm_kernel, feat_total=F, block_k=block_k)

    out = pl.pallas_call(
        kernel,
        out_shape=jax.ShapeDtypeStruct((B, 1), x.dtype),
        grid_spec=pltpu.PrefetchScalarGridSpec(
            num_scalar_prefetch=0,
            grid=(n_b, n_k),            # batch axis leading (parallel), reduction last
            in_specs=[pl.BlockSpec((block_b, block_k), lambda i, k: (i, k))],
            out_specs=pl.BlockSpec((block_b, 1), lambda i, k: (i, 0)),
            scratch_shapes=[pltpu.VMEM((block_b, 1), jnp.float32)],
        ),
        compiler_params=pltpu.CompilerParams(
            dimension_semantics=("parallel", "arbitrary")),
    )(xf)

    return out


def _ref_l2norm(x):
    xf = x.reshape(x.shape[0], -1)
    denom = math.prod(x.shape[1:]) if x.ndim > 1 else 1
    return jnp.sqrt(jnp.sum(xf.astype(jnp.float32) ** 2, axis=1, keepdims=True)) / denom + _EPS


if __name__ == "__main__":
    key = jax.random.PRNGKey(0)

    # 1) Small NCHW input consistent with the module's forward.
    x = jax.random.normal(key, (2, 4, 16, 16), dtype=jnp.float32)
    y = jax.block_until_ready(l2norm(x))
    y_ref = _ref_l2norm(x)
    assert y.shape == (2, 1), y.shape
    assert jnp.allclose(y, y_ref, rtol=1e-5, atol=1e-6), (y, y_ref)

    # 2) Shapes that are NOT multiples of any tile size (ragged batch + feature
    #    dims; exercises the full-dim-block path, F = 5*7*11 = 385).
    x2 = jax.random.normal(jax.random.PRNGKey(1), (3, 5, 7, 11), dtype=jnp.float32)
    y2 = jax.block_until_ready(l2norm(x2))
    y2_ref = _ref_l2norm(x2)
    assert y2.shape == (3, 1), y2.shape
    assert jnp.allclose(y2, y2_ref, rtol=1e-5, atol=1e-6), (y2, y2_ref)

    # 3) Force small explicit tiles so the in-kernel tail mask and the partial
    #    batch block are both exercised (F=385 with block_k=128 -> ragged tail;
    #    B=10 with block_b=8 -> partial last batch block).
    x3 = jax.random.normal(jax.random.PRNGKey(2), (10, 5, 7, 11), dtype=jnp.float32)
    y3 = jax.block_until_ready(l2norm(x3, block_b=8, block_k=128))
    y3_ref = _ref_l2norm(x3)
    assert y3.shape == (10, 1), y3.shape
    assert jnp.allclose(y3, y3_ref, rtol=1e-5, atol=1e-6), (y3, y3_ref)

    print("KERNEL_OK")
</pallas_src>

<mosaic_0001>
module attributes {stable_mosaic.version = 11 : i64} {
  func.func @_l2norm_kernel(%arg0: i32, %arg1: i32, %arg2: memref<2x1024xf32, #tpu.memory_space<vmem>>, %arg3: memref<2x1xf32, #tpu.memory_space<vmem>>, %arg4: memref<2x1xf32, #tpu.memory_space<vmem>>) attributes {dimension_semantics = [#tpu.dimension_semantics<parallel>, #tpu.dimension_semantics<arbitrary>], iteration_bounds = array<i64: 1, 1>, scalar_prefetch = 0 : i64, scratch_operands = 1 : i64, tpu.core_type = #tpu.core_type<tc>, window_params = [{transform_indices = @transform_0, window_bounds = array<i64: 2, 1024>}, {transform_indices = @transform_1, window_bounds = array<i64: 2, 1>}]} {
    %c0_i32 = arith.constant 0 : i32
    %0 = arith.cmpi eq, %arg1, %c0_i32 : i32
    %1 = arith.extui %0 : i1 to i32
    %c0_i32_0 = arith.constant 0 : i32
    %2 = arith.cmpi ne, %1, %c0_i32_0 : i32
    scf.if %2 {
      %cst_8 = arith.constant 0.000000e+00 : f32
      %13 = vector.broadcast %cst_8 : f32 to vector<2x1xf32>
      %c0_9 = arith.constant 0 : index
      %c0_10 = arith.constant 0 : index
      %14 = vector.load %arg4[%c0_9, %c0_10] : memref<2x1xf32, #tpu.memory_space<vmem>>, vector<2x1xf32>
      tpu.vector_store %arg4[%c0_9, %c0_10], %13 {strides = array<i32>} : memref<2x1xf32, #tpu.memory_space<vmem>>, vector<2x1xf32>,
    } else {
    }
    %c0 = arith.constant 0 : index
    %c0_1 = arith.constant 0 : index
    %3 = vector.load %arg2[%c0, %c0_1] : memref<2x1024xf32, #tpu.memory_space<vmem>>, vector<2x1024xf32>
    %c0_2 = arith.constant 0 : index
    %c0_3 = arith.constant 0 : index
    %4 = vector.load %arg4[%c0_2, %c0_3] : memref<2x1xf32, #tpu.memory_space<vmem>>, vector<2x1xf32>
    %5 = arith.mulf %3, %3 : vector<2x1024xf32>
    %cst = arith.constant dense<0.000000e+00> : vector<2xf32>
    %6 = vector.multi_reduction <add>, %5, %cst [1] : vector<2x1024xf32> to vector<2xf32>
    %7 = vector.shape_cast %6 : vector<2xf32> to vector<2x1xf32>
    %8 = arith.addf %4, %7 : vector<2x1xf32>
    %c0_4 = arith.constant 0 : index
    %c0_5 = arith.constant 0 : index
    %9 = vector.load %arg4[%c0_4, %c0_5] : memref<2x1xf32, #tpu.memory_space<vmem>>, vector<2x1xf32>
    tpu.vector_store %arg4[%c0_4, %c0_5], %8 {strides = array<i32>} : memref<2x1xf32, #tpu.memory_space<vmem>>, vector<2x1xf32>,
    %c0_i32_6 = arith.constant 0 : i32
    %10 = arith.cmpi eq, %arg1, %c0_i32_6 : i32
    %11 = arith.extui %10 : i1 to i32
    %c0_i32_7 = arith.constant 0 : i32
    %12 = arith.cmpi ne, %11, %c0_i32_7 : i32
    scf.if %12 {
      %c0_8 = arith.constant 0 : index
      %c0_9 = arith.constant 0 : index
      %13 = vector.load %arg4[%c0_8, %c0_9] : memref<2x1xf32, #tpu.memory_space<vmem>>, vector<2x1xf32>
      %14 = math.sqrt %13 : vector<2x1xf32>
      %cst_10 = arith.constant 1.024000e+03 : f32
      %15 = vector.broadcast %cst_10 : f32 to vector<2x1xf32>
      %16 = arith.divf %14, %15 : vector<2x1xf32>
      %cst_11 = arith.constant 9.99999974E-6 : f32
      %17 = vector.broadcast %cst_11 : f32 to vector<2x1xf32>
      %18 = arith.addf %16, %17 : vector<2x1xf32>
      %c0_12 = arith.constant 0 : index
      %c0_13 = arith.constant 0 : index
      %19 = vector.load %arg3[%c0_12, %c0_13] : memref<2x1xf32, #tpu.memory_space<vmem>>, vector<2x1xf32>
      tpu.vector_store %arg3[%c0_12, %c0_13], %18 {strides = array<i32>} : memref<2x1xf32, #tpu.memory_space<vmem>>, vector<2x1xf32>,
    } else {
    }
    return
  }
  func.func @transform_0(%arg0: i32, %arg1: i32) -> (i32, i32) {
    %c0_i32 = arith.constant 0 : i32
    return %arg0, %arg1 : i32, i32
  }
  func.func @transform_1(%arg0: i32, %arg1: i32) -> (i32, i32) {
    %c0_i32 = arith.constant 0 : i32
    %c0_i32_0 = arith.constant 0 : i32
    return %arg0, %c0_i32 : i32, i32
  }
}

</mosaic_0001>

<llo_original>
// kernel: tpu_custom_call.1
$region0: #{tpu_custom_call.1}
  #allocation0 [shape = 'u32[]', space=smem, size = 0x4, offset = 0x4, fixed_abs, tag = 'smem constant byte address 0x4 - core index']
  #allocation1 [shape = 'u32[72,128]{1,0:T(1,128)}', space=vmem, size = 0x9000, scoped, tag = 'internal scratch']
  #allocation2 [shape = 'f32[2,1]{1,0:T(2,128)}', space=vmem, size = 0x400, scoped, tag = 'scratch operand']
  %s0 = inlined_call_operand.hbm [shape: f32[2,1024], index: 0, kind: input, shape index: {}]
  %s1 = inlined_call_operand.vmem [shape: f32[2,1], index: 1, kind: output, shape index: {}]
  %s2 = sld [smem:[#allocation0]]
  $region26: #{tpu_custom_call.1} parent=0
    _
  %s4 = ssub.s32 1, %s2
  %s5 = scalar_select 0, %s4, %s2
  $region1: #{tpu_custom_call.1} parent=0
    #allocation3 [shape = 'u8[8192]{0}', space=vmem, size = 0x2000, scoped, tag = 'input window, operand 0, single buffered']
    #allocation4 [shape = 's32[1]{0}', space=sflag, size = 0x4, scoped, tag = 'scoped memory for tpu_custom_call.1']
    %6 = vsyncpa [#allocation4], 0
    // Predicated region
    $region2: #{tpu_custom_call.1} parent=1 // pred_check
      _
    $region3: #{tpu_custom_call.1} parent=1 // pred_check_branch
      %8 = sbr.rel (0) target = $region5
    $region4: #{tpu_custom_call.1} parent=1 // pred_region
      %10 = vsyncadd [#allocation4], 0
      %s12 = sshll.u32 %s0, 4
      %s13 = int_to_ptr.hbm [resolvable:$true] %s12
      %s14 = sshll.u32 [#allocation3], 4
      %s15 = int_to_ptr.vmem [resolvable:$true] %s14
      %17 = dma.hbm_to_vmem [thread:$0]  %s13, 256, %s15, [#allocation4]
    $region5: #{tpu_custom_call.1} parent=1 // pred_fallthru
      _
    // Predicated region
    $region6: #{tpu_custom_call.1} parent=1 // pred_check
      _
    $region7: #{tpu_custom_call.1} parent=1 // pred_check_branch
      %19 = sbr.rel (0) target = $region9
    $region8: #{tpu_custom_call.1} parent=1 // pred_region
      %21 = dma.done [#allocation4], 256
    $region9: #{tpu_custom_call.1} parent=1 // pred_fallthru
      _
    %p22 = scmp.eq.s32.totalorder 0, 0
    // Predicated region
    $region10: #{tpu_custom_call.1} parent=1 // pred_check
      %p23 = pneg %p22
    $region11: #{tpu_custom_call.1} parent=1 // pred_check_branch
      %25 = sbr.rel (%p23) target = $region13
    $region12: #{tpu_custom_call.1} parent=1 // pred_region
      %vm26 = vcmask 1024
      %27 = vst.msk [vmem:[#allocation2] sm:$0x3] %vm26, 0.0
    $region13: #{tpu_custom_call.1} parent=1 // pred_fallthru
      _
    %v28 = vld [vmem:[#allocation3] sm:$0xff]
    %v29 = vld [vmem:[#allocation3 + $0x8] sm:$0xff]
    %v30 = vld [vmem:[#allocation2] sm:$0x3]
    %v31 = vmul.f32 %v28, %v28
    %v32 = vmul.f32 %v29, %v29
    %35 = vst [vmem:[#allocation1] ss:$4 sm:$0xff] %v31
    %s36 = scalar_lea.vmem [#allocation1], 32
    %37 = vst [vmem:[%s36] ss:$4 sm:$0xff] %v32
    %v38 = vld.sshfl [vmem:[#allocation1] sm:$0xff pattern:$0x73625140]
    %v39 = vld.sshfl [vmem:[#allocation1 + $0x8] sm:$0xff pattern:$0x73625140]
    %v40 = vld.sshfl [vmem:[#allocation1 + $0x10] sm:$0xff pattern:$0x73625140]
    %v41 = vld.sshfl [vmem:[#allocation1 + $0x18] sm:$0xff pattern:$0x73625140]
    %v42 = vld.sshfl [vmem:[#allocation1 + $0x20] sm:$0xff pattern:$0x73625140]
    %v43 = vld.sshfl [vmem:[#allocation1 + $0x28] sm:$0xff pattern:$0x73625140]
    %v44 = vld.sshfl [vmem:[#allocation1 + $0x30] sm:$0xff pattern:$0x73625140]
    %v45 = vld.sshfl [vmem:[#allocation1 + $0x38] sm:$0xff pattern:$0x73625140]
    %vm54 = vcmask 1041408
    %v55 = vsel %vm54, %v38, 0.0
    %v56 = vsel %vm54, %v39, 0.0
    %v57 = vadd.f32 %v55, %v56
    %v58 = vsel %vm54, %v40, 0.0
    %v59 = vadd.f32 %v57, %v58
    %v60 = vsel %vm54, %v41, 0.0
    %v61 = vadd.f32 %v59, %v60
    %v62 = vsel %vm54, %v42, 0.0
    %v63 = vadd.f32 %v61, %v62
    %v64 = vsel %vm54, %v43, 0.0
    %v65 = vadd.f32 %v63, %v64
    %v66 = vsel %vm54, %v44, 0.0
    %v67 = vadd.f32 %v65, %v66
    %v68 = vsel %vm54, %v45, 0.0
    %v69 = vadd.f32 %v67, %v68
    %70 = vadd.xlane.f32.xlu0 %v69
    %v71 = vpop.xlane.xlu0 %70
    %v72 = vadd.f32 %v30, %v71
    %vm73 = vcmask 1024
    %74 = vst.msk [vmem:[#allocation2] sm:$0x3] %vm73, %v72
    // Predicated region
    $region14: #{tpu_custom_call.1} parent=1 // pred_check
      %p75 = pneg %p22
    $region15: #{tpu_custom_call.1} parent=1 // pred_check_branch
      %77 = sbr.rel (%p75) target = $region17
    $region16: #{tpu_custom_call.1} parent=1 // pred_region
      %v78 = vld [vmem:[#allocation2] sm:$0x3]
      %v79 = vrsqrt.pop %v78
      %v80 = vmul.f32 %v79, %v78
      %v81 = vmul.f32 %v80, %v79
      %v82 = vmul.f32 0.5, %v81
      %v83 = vsub.f32 1.5, %v82
      %v84 = vmul.f32 %v79, %v83
      %v85 = vmul.f32 %v78, %v84
      %vm86 = vcmp.eq.f32.partialorder %v78, inf
      %v87 = vsel %vm86, %v78, %v85
      %vm88 = vcmp.eq.f32.partialorder %v78, 0.0
      %v89 = vand.u32 %v78, 2147483648
      %v90 = vsel %vm88, %v89, %v87
      %v91 = vrcp.pop 1024.0
      %v92 = vmul.f32 1024.0, %v91
      %v93 = vsub.f32 1.0, %v92
      %v94 = vmul.f32 %v91, %v93
      %v95 = vadd.f32 %v91, %v94
      %vm96 = vweird.f32 %v91
      %v97 = vsel %vm96, %v91, %v95
      %v98 = vmul.f32 %v90, %v97
      %v99 = vadd.f32 %v98, 1e-05
      %100 = vst.msk [vmem:[%s1] sm:$0x3] %vm73, %v99
    $region17: #{tpu_custom_call.1} parent=1 // pred_fallthru
      _
    // Predicated region
    $region18: #{tpu_custom_call.1} parent=1 // pred_check
      _
    $region19: #{tpu_custom_call.1} parent=1 // pred_check_branch
      %102 = sbr.rel (0) target = $region21
    $region20: #{tpu_custom_call.1} parent=1 // pred_region
      _
    $region21: #{tpu_custom_call.1} parent=1 // pred_fallthru
      _
    // Predicated region
    $region22: #{tpu_custom_call.1} parent=1 // pred_check
      _
    $region23: #{tpu_custom_call.1} parent=1 // pred_check_branch
      %104 = sbr.rel (0) target = $region25
    $region24: #{tpu_custom_call.1} parent=1 // pred_region
      _
    $region25: #{tpu_custom_call.1} parent=1 // pred_fallthru
      _
    %105 = vsyncpa [#allocation4], 1

</llo_original>
